<compile_context>
chip_gen: v5e
topology: v5e:2x2
jax: 0.10.0
libtpu: 0.0.40
codegen_flags: <defaults>
</compile_context>

<pallas_src>
import jax
import jax.numpy as jnp
from jax import lax
from jax.experimental import pallas as pl
from jax.experimental.pallas import tpu as pltpu

EPS = 1e-5                  # nn.LayerNorm default eps
EPS4 = 4.0 * EPS            # closed-form LN with un-halved difference
NEG_SLOPE = 0.2             # LeakyReLU slope
LANE = 128
SUB = 8
TC = 512                    # lane extent of every tile (multiple of 128)
TR = 256                    # max sublane extent of a tile (multiple of 8)
VMEM_LIMIT = 32 * 1024 * 1024


def _cdiv(a, b):
    return -(-a // b)


def _round_up(a, b):
    return ((a + b - 1) // b) * b


def regressor_kernel(p_ref, x_ref, o_ref):
    # p_ref: SMEM (6,) f32 folded params  [A0, A1, C0, C1, B, D] (scalar prefetch)
    # x_ref: VMEM (3, 2, tr, TC) f32      (group, feature, sublane-batch, lane-batch)
    # o_ref: VMEM (3, tr, TC) f32
    x = x_ref[...]                              # (3, 2, tr, TC)
    u = x[:, 0] - x[:, 1]                       # (3, tr, TC)

    # LayerNorm(2) #1 closed form + Linear(2,2) folded:  y_j = A_j*n + C_j
    n = u * lax.rsqrt(u * u + EPS4)             # rsqrt -> EUP slot
    y0 = p_ref[0] * n + p_ref[2]
    y1 = p_ref[1] * n + p_ref[3]

    # LeakyReLU(0.2)
    y0 = jnp.where(y0 >= 0.0, y0, NEG_SLOPE * y0)
    y1 = jnp.where(y1 >= 0.0, y1, NEG_SLOPE * y1)

    # LayerNorm(2) #2 closed form + Linear(2,1) folded:  z = B*n2 + D
    u2 = y0 - y1
    n2 = u2 * lax.rsqrt(u2 * u2 + EPS4)
    z = p_ref[4] * n2 + p_ref[5]                # (3, tr, TC)

    # y ** [[1],[1],[2]]: static index on the leading group axis (no iota / mod)
    o_ref[0] = z[0]
    o_ref[1] = z[1]
    o_ref[2] = z[2] * z[2]


def pack_params(params):
    """Fold (LayerNorm affine -> Linear) pairs into 6 scalars (exact in real arithmetic).

    With n = normalized value of feature 0 (feature 1 is -n):
      y_j = (g1[0]*w1[0,j] - g1[1]*w1[1,j]) * n + (b1[0]*w1[0,j] + b1[1]*w1[1,j] + bb1[j])
      z   = (g2[0]*w2[0,0] - g2[1]*w2[1,0]) * n2 + (b2[0]*w2[0,0] + b2[1]*w2[1,0] + bb2[0])
    """
    g1, b1, w1, bb1, g2, b2, w2, bb2 = [a.astype(jnp.float32) for a in params]
    A = g1[0] * w1[0, :] - g1[1] * w1[1, :]                 # (2,)
    C = b1[0] * w1[0, :] + b1[1] * w1[1, :] + bb1           # (2,)
    B = g2[0] * w2[0, 0] - g2[1] * w2[1, 0]
    D = b2[0] * w2[0, 0] + b2[1] * w2[1, 0] + bb2[0]
    return jnp.stack([A[0], A[1], C[0], C[1], B, D]).astype(jnp.float32)


def regressor_forward(x, params):
    """x: (batch, 3, 2) float32.  Returns (batch, 3, 1) float32."""
    batch = x.shape[0]
    assert x.shape[1:] == (3, 2)
    x = x.astype(jnp.float32)

    # --- choose the (R, C) layout of the batch axis and the sublane tile tr ---
    C = TC
    R0 = max(SUB, _round_up(_cdiv(batch, C), SUB))
    if R0 <= SUB:                       # tiny input: one minimal (8, 512) block
        R, tr = R0, R0
    else:
        nb = max(2, _cdiv(R0, TR))      # >=2 grid steps so both v7x TCs get work
        tr = _round_up(_cdiv(R0, nb), SUB)
        R = tr * nb
    grid = (R // tr,)
    batch_pad = R * C

    # group-major, feature-next, batch dense on (sublane, lane): (3, 2, R, C)
    xt = jnp.transpose(x, (1, 2, 0))                                  # (3, 2, batch)
    xt = jnp.pad(xt, ((0, 0), (0, 0), (0, batch_pad - batch)))
    xt = xt.reshape(3, 2, R, C)

    p = pack_params(params)                                           # (6,) -> SMEM

    out = pl.pallas_call(
        regressor_kernel,
        out_shape=jax.ShapeDtypeStruct((3, R, C), jnp.float32),
        grid_spec=pltpu.PrefetchScalarGridSpec(
            num_scalar_prefetch=1,
            grid=grid,
            in_specs=[pl.BlockSpec((3, 2, tr, C), lambda i, p_smem: (0, 0, i, 0))],
            out_specs=pl.BlockSpec((3, tr, C), lambda i, p_smem: (0, i, 0)),
        ),
        compiler_params=pltpu.CompilerParams(
            dimension_semantics=("parallel",),
            vmem_limit_bytes=VMEM_LIMIT),
    )(p, xt)

    out = out.reshape(3, batch_pad)[:, :batch]                        # (3, batch)
    return jnp.transpose(out, (1, 0)).reshape(batch, 3, 1)


def init_params(key):
    """Deterministic synthetic parameters with the shapes the nn.Module implies."""
    k1, k2, k3, k4 = jax.random.split(key, 4)
    g1 = jnp.ones((2,), jnp.float32)                        # LayerNorm(2) weight
    b1 = jnp.zeros((2,), jnp.float32)                       # LayerNorm(2) bias
    w1 = jax.random.normal(k1, (2, 2), jnp.float32) * 0.5   # Linear(2,2) weight (in,out)
    bb1 = jax.random.normal(k2, (2,), jnp.float32) * 0.1    # Linear(2,2) bias
    g2 = jnp.ones((2,), jnp.float32)                        # LayerNorm(2) weight
    b2 = jnp.zeros((2,), jnp.float32)                       # LayerNorm(2) bias
    w2 = jax.random.normal(k3, (2, 1), jnp.float32) * 0.5   # Linear(2,1) weight (in,out)
    bb2 = jax.random.normal(k4, (1,), jnp.float32) * 0.1    # Linear(2,1) bias
    return (g1, b1, w1, bb1, g2, b2, w2, bb2)


def reference_forward(x, params):
    """Pure-JAX reference (unfused, matches the PyTorch forward semantics)."""
    g1, b1, w1, bb1, g2, b2, w2, bb2 = params

    def ln(h, g, b):
        mu = jnp.mean(h, axis=-1, keepdims=True)
        var = jnp.mean((h - mu) ** 2, axis=-1, keepdims=True)   # biased var (torch)
        return (h - mu) / jnp.sqrt(var + EPS) * g + b

    h = ln(x, g1, b1)
    h = h @ w1 + bb1
    h = jnp.where(h >= 0, h, NEG_SLOPE * h)
    h = ln(h, g2, b2)
    y = h @ w2 + bb2                                             # (batch, 3, 1)
    exp = jnp.array([[1.0], [1.0], [2.0]], jnp.float32)          # (3, 1)
    return jnp.where(exp == 2.0, y * y, y)


if __name__ == "__main__":
    key = jax.random.PRNGKey(0)
    kx, kp = jax.random.split(key)

    batch = 2
    x = jax.random.normal(kx, (batch, 3, 2), jnp.float32)        # (2, 3, 2)
    params = init_params(kp)

    out = regressor_forward(x, params)
    out = jax.block_until_ready(out)

    ref = reference_forward(x, params)
    assert out.shape == (batch, 3, 1)
    assert jnp.allclose(out, ref, atol=1e-5, rtol=1e-5), (out, ref)

    print("KERNEL_OK")
</pallas_src>

<mosaic_0001>
module attributes {stable_mosaic.version = 11 : i64} {
  func.func @regressor_kernel(%arg0: i32, %arg1: memref<6xf32, #tpu.memory_space<smem>>, %arg2: memref<3x2x8x512xf32, #tpu.memory_space<vmem>>, %arg3: memref<3x8x512xf32, #tpu.memory_space<vmem>>) attributes {dimension_semantics = [#tpu.dimension_semantics<parallel>], iteration_bounds = array<i64: 1>, scalar_prefetch = 1 : i64, scratch_operands = 0 : i64, tpu.core_type = #tpu.core_type<tc>, window_params = [{transform_indices = @transform_0, window_bounds = array<i64: 3, 2, 8, 512>}, {transform_indices = @transform_1, window_bounds = array<i64: 3, 8, 512>}]} {
    %c0 = arith.constant 0 : index
    %c0_0 = arith.constant 0 : index
    %c0_1 = arith.constant 0 : index
    %c0_2 = arith.constant 0 : index
    %0 = vector.load %arg2[%c0, %c0_0, %c0_1, %c0_2] : memref<3x2x8x512xf32, #tpu.memory_space<vmem>>, vector<3x2x8x512xf32>
    %1 = vector.extract_strided_slice %0 {offsets = [0, 0, 0, 0], sizes = [3, 1, 8, 512], strides = [1, 1, 1, 1]} : vector<3x2x8x512xf32> to vector<3x1x8x512xf32>
    %2 = vector.shape_cast %1 : vector<3x1x8x512xf32> to vector<3x8x512xf32>
    %3 = vector.extract_strided_slice %0 {offsets = [0, 1, 0, 0], sizes = [3, 1, 8, 512], strides = [1, 1, 1, 1]} : vector<3x2x8x512xf32> to vector<3x1x8x512xf32>
    %4 = vector.shape_cast %3 : vector<3x1x8x512xf32> to vector<3x8x512xf32>
    %5 = arith.subf %2, %4 : vector<3x8x512xf32>
    %6 = arith.mulf %5, %5 : vector<3x8x512xf32>
    %cst = arith.constant 4.000000e-05 : f32
    %7 = vector.broadcast %cst : f32 to vector<3x8x512xf32>
    %8 = arith.addf %6, %7 : vector<3x8x512xf32>
    %9 = math.rsqrt %8 : vector<3x8x512xf32>
    %10 = arith.mulf %5, %9 : vector<3x8x512xf32>
    %c0_3 = arith.constant 0 : index
    %11 = memref.load %arg1[%c0_3] : memref<6xf32, #tpu.memory_space<smem>>
    %12 = vector.broadcast %11 : f32 to vector<3x8x512xf32>
    %13 = arith.mulf %12, %10 : vector<3x8x512xf32>
    %c2 = arith.constant 2 : index
    %14 = memref.load %arg1[%c2] : memref<6xf32, #tpu.memory_space<smem>>
    %15 = vector.broadcast %14 : f32 to vector<3x8x512xf32>
    %16 = arith.addf %13, %15 : vector<3x8x512xf32>
    %c1 = arith.constant 1 : index
    %17 = memref.load %arg1[%c1] : memref<6xf32, #tpu.memory_space<smem>>
    %18 = vector.broadcast %17 : f32 to vector<3x8x512xf32>
    %19 = arith.mulf %18, %10 : vector<3x8x512xf32>
    %c3 = arith.constant 3 : index
    %20 = memref.load %arg1[%c3] : memref<6xf32, #tpu.memory_space<smem>>
    %21 = vector.broadcast %20 : f32 to vector<3x8x512xf32>
    %22 = arith.addf %19, %21 : vector<3x8x512xf32>
    %cst_4 = arith.constant 0.000000e+00 : f32
    %23 = vector.broadcast %cst_4 : f32 to vector<3x8x512xf32>
    %24 = arith.cmpf oge, %16, %23 : vector<3x8x512xf32>
    %cst_5 = arith.constant 2.000000e-01 : f32
    %25 = vector.broadcast %cst_5 : f32 to vector<3x8x512xf32>
    %26 = arith.mulf %25, %16 : vector<3x8x512xf32>
    %27 = arith.select %24, %16, %26 : vector<3x8x512xi1>, vector<3x8x512xf32>
    %cst_6 = arith.constant 0.000000e+00 : f32
    %28 = vector.broadcast %cst_6 : f32 to vector<3x8x512xf32>
    %29 = arith.cmpf oge, %22, %28 : vector<3x8x512xf32>
    %cst_7 = arith.constant 2.000000e-01 : f32
    %30 = vector.broadcast %cst_7 : f32 to vector<3x8x512xf32>
    %31 = arith.mulf %30, %22 : vector<3x8x512xf32>
    %32 = arith.select %29, %22, %31 : vector<3x8x512xi1>, vector<3x8x512xf32>
    %33 = arith.subf %27, %32 : vector<3x8x512xf32>
    %34 = arith.mulf %33, %33 : vector<3x8x512xf32>
    %cst_8 = arith.constant 4.000000e-05 : f32
    %35 = vector.broadcast %cst_8 : f32 to vector<3x8x512xf32>
    %36 = arith.addf %34, %35 : vector<3x8x512xf32>
    %37 = math.rsqrt %36 : vector<3x8x512xf32>
    %38 = arith.mulf %33, %37 : vector<3x8x512xf32>
    %c4 = arith.constant 4 : index
    %39 = memref.load %arg1[%c4] : memref<6xf32, #tpu.memory_space<smem>>
    %40 = vector.broadcast %39 : f32 to vector<3x8x512xf32>
    %41 = arith.mulf %40, %38 : vector<3x8x512xf32>
    %c5 = arith.constant 5 : index
    %42 = memref.load %arg1[%c5] : memref<6xf32, #tpu.memory_space<smem>>
    %43 = vector.broadcast %42 : f32 to vector<3x8x512xf32>
    %44 = arith.addf %41, %43 : vector<3x8x512xf32>
    %45 = vector.extract_strided_slice %44 {offsets = [0, 0, 0], sizes = [1, 8, 512], strides = [1, 1, 1]} : vector<3x8x512xf32> to vector<1x8x512xf32>
    %46 = vector.shape_cast %45 : vector<1x8x512xf32> to vector<8x512xf32>
    %c0_9 = arith.constant 0 : index
    %c0_10 = arith.constant 0 : index
    %c0_11 = arith.constant 0 : index
    %47 = vector.load %arg3[%c0_9, %c0_10, %c0_11] : memref<3x8x512xf32, #tpu.memory_space<vmem>>, vector<1x8x512xf32>
    %48 = vector.shape_cast %47 : vector<1x8x512xf32> to vector<8x512xf32>
    %49 = vector.shape_cast %46 : vector<8x512xf32> to vector<1x8x512xf32>
    tpu.vector_store %arg3[%c0_9, %c0_10, %c0_11], %49 {strides = array<i32>} : memref<3x8x512xf32, #tpu.memory_space<vmem>>, vector<1x8x512xf32>,
    %50 = vector.extract_strided_slice %44 {offsets = [1, 0, 0], sizes = [1, 8, 512], strides = [1, 1, 1]} : vector<3x8x512xf32> to vector<1x8x512xf32>
    %51 = vector.shape_cast %50 : vector<1x8x512xf32> to vector<8x512xf32>
    %c1_12 = arith.constant 1 : index
    %c0_13 = arith.constant 0 : index
    %c0_14 = arith.constant 0 : index
    %52 = vector.load %arg3[%c1_12, %c0_13, %c0_14] : memref<3x8x512xf32, #tpu.memory_space<vmem>>, vector<1x8x512xf32>
    %53 = vector.shape_cast %52 : vector<1x8x512xf32> to vector<8x512xf32>
    %54 = vector.shape_cast %51 : vector<8x512xf32> to vector<1x8x512xf32>
    tpu.vector_store %arg3[%c1_12, %c0_13, %c0_14], %54 {strides = array<i32>} : memref<3x8x512xf32, #tpu.memory_space<vmem>>, vector<1x8x512xf32>,
    %55 = vector.extract_strided_slice %44 {offsets = [2, 0, 0], sizes = [1, 8, 512], strides = [1, 1, 1]} : vector<3x8x512xf32> to vector<1x8x512xf32>
    %56 = vector.shape_cast %55 : vector<1x8x512xf32> to vector<8x512xf32>
    %57 = vector.extract_strided_slice %44 {offsets = [2, 0, 0], sizes = [1, 8, 512], strides = [1, 1, 1]} : vector<3x8x512xf32> to vector<1x8x512xf32>
    %58 = vector.shape_cast %57 : vector<1x8x512xf32> to vector<8x512xf32>
    %59 = arith.mulf %56, %58 : vector<8x512xf32>
    %c2_15 = arith.constant 2 : index
    %c0_16 = arith.constant 0 : index
    %c0_17 = arith.constant 0 : index
    %60 = vector.load %arg3[%c2_15, %c0_16, %c0_17] : memref<3x8x512xf32, #tpu.memory_space<vmem>>, vector<1x8x512xf32>
    %61 = vector.shape_cast %60 : vector<1x8x512xf32> to vector<8x512xf32>
    %62 = vector.shape_cast %59 : vector<8x512xf32> to vector<1x8x512xf32>
    tpu.vector_store %arg3[%c2_15, %c0_16, %c0_17], %62 {strides = array<i32>} : memref<3x8x512xf32, #tpu.memory_space<vmem>>, vector<1x8x512xf32>,
    return
  }
  func.func @transform_0(%arg0: i32, %arg1: memref<6xf32, #tpu.memory_space<smem>>) -> (i32, i32, i32, i32) {
    %c0_i32 = arith.constant 0 : i32
    %c0_i32_0 = arith.constant 0 : i32
    %c0_i32_1 = arith.constant 0 : i32
    %c0_i32_2 = arith.constant 0 : i32
    return %c0_i32, %c0_i32_0, %arg0, %c0_i32_1 : i32, i32, i32, i32
  }
  func.func @transform_1(%arg0: i32, %arg1: memref<6xf32, #tpu.memory_space<smem>>) -> (i32, i32, i32) {
    %c0_i32 = arith.constant 0 : i32
    %c0_i32_0 = arith.constant 0 : i32
    %c0_i32_1 = arith.constant 0 : i32
    return %c0_i32, %arg0, %c0_i32_0 : i32, i32, i32
  }
}

</mosaic_0001>

<llo_original>
// kernel: tpu_custom_call.1
$region0: #{tpu_custom_call.1}
  #allocation0 [shape = 'u32[]', space=smem, size = 0x4, offset = 0x4, fixed_abs, tag = 'smem constant byte address 0x4 - core index']
  #allocation1 [shape = 'u32[72,128]{1,0:T(1,128)}', space=vmem, size = 0x9000, scoped, tag = 'internal scratch']
  #allocation2 [shape = 's32[1]{0}', space=sflag, size = 0x4, scoped, tag = 'scoped memory for tpu_custom_call.1']
  #allocation3 [shape = 'u8[512]{0}', space=smem, size = 0x200, scoped, tag = 'prefetched SMEM operand 0']
  %s0 = inlined_call_operand.hbm [shape: f32[6], index: 0, kind: input, shape index: {}]
  %s1 = inlined_call_operand.hbm [shape: f32[3,2,8,512], index: 1, kind: input, shape index: {}]
  %s2 = inlined_call_operand.hbm [shape: f32[3,8,512], index: 2, kind: output, shape index: {}]
  %s3 = sld [smem:[#allocation0]]
  $region18: #{tpu_custom_call.1} parent=0
    _
  %s5 = ssub.s32 1, %s3
  %s6 = scalar_select 0, %s5, %s3
  %s8 = sshll.u32 %s0, 4
  %s9 = int_to_ptr.hbm [resolvable:$true] %s8
  %11 = dma.hbm_to_smem %s9, 16, [#allocation3], [#allocation2]
  %13 = dma.done [#allocation2], 16
  %14 = sfence
  $region1: #{tpu_custom_call.1} parent=0
    #allocation4 [shape = 'u8[98304]{0}', space=vmem, size = 0x18000, scoped, tag = 'input window, operand 1, single buffered']
    #allocation5 [shape = 's32[1]{0}', space=sflag, size = 0x4, scoped, tag = 'scoped memory for tpu_custom_call.1']
    #allocation6 [shape = 's32[1]{0}', space=sflag, size = 0x4, scoped, tag = 'scoped memory for tpu_custom_call.1']
    #allocation7 [shape = 'u8[49152]{0}', space=vmem, size = 0xc000, scoped, tag = 'output window, operand 0, single buffered']
    %15 = vsyncpa [#allocation5], 0
    %16 = vsyncpa [#allocation6], 0
    // Predicated region
    $region2: #{tpu_custom_call.1} parent=1 // pred_check
      _
    $region3: #{tpu_custom_call.1} parent=1 // pred_check_branch
      %18 = sbr.rel (0) target = $region5
    $region4: #{tpu_custom_call.1} parent=1 // pred_region
      %20 = vsyncadd [#allocation5], 0
      %s21 = sshll.u32 %s1, 4
      %s22 = int_to_ptr.hbm [resolvable:$true] %s21
      %s23 = sshll.u32 [#allocation4], 4
      %s24 = int_to_ptr.vmem [resolvable:$true] %s23
      %29 = dma.hbm_to_vmem [thread:$0]  %s22, 3072, %s24, [#allocation5], 512, 512, 32
    $region5: #{tpu_custom_call.1} parent=1 // pred_fallthru
      _
    // Predicated region
    $region6: #{tpu_custom_call.1} parent=1 // pred_check
      _
    $region7: #{tpu_custom_call.1} parent=1 // pred_check_branch
      %31 = sbr.rel (0) target = $region9
    $region8: #{tpu_custom_call.1} parent=1 // pred_region
      %33 = dma.done [#allocation5], 3072
    $region9: #{tpu_custom_call.1} parent=1 // pred_fallthru
      _
    %v34 = vld [vmem:[#allocation4] sm:$0xff]
    %v35 = vld [vmem:[#allocation4 + $0x8] sm:$0xff]
    %v36 = vld [vmem:[#allocation4 + $0x10] sm:$0xff]
    %v37 = vld [vmem:[#allocation4 + $0x18] sm:$0xff]
    %v38 = vld [vmem:[#allocation4 + $0x20] sm:$0xff]
    %v39 = vld [vmem:[#allocation4 + $0x28] sm:$0xff]
    %v40 = vld [vmem:[#allocation4 + $0x30] sm:$0xff]
    %v41 = vld [vmem:[#allocation4 + $0x38] sm:$0xff]
    %v42 = vld [vmem:[#allocation4 + $0x40] sm:$0xff]
    %v43 = vld [vmem:[#allocation4 + $0x48] sm:$0xff]
    %v44 = vld [vmem:[#allocation4 + $0x50] sm:$0xff]
    %v45 = vld [vmem:[#allocation4 + $0x58] sm:$0xff]
    %v46 = vld [vmem:[#allocation4 + $0x60] sm:$0xff]
    %v47 = vld [vmem:[#allocation4 + $0x68] sm:$0xff]
    %v48 = vld [vmem:[#allocation4 + $0x70] sm:$0xff]
    %v49 = vld [vmem:[#allocation4 + $0x78] sm:$0xff]
    %v50 = vld [vmem:[#allocation4 + $0x80] sm:$0xff]
    %v51 = vld [vmem:[#allocation4 + $0x88] sm:$0xff]
    %v52 = vld [vmem:[#allocation4 + $0x90] sm:$0xff]
    %v53 = vld [vmem:[#allocation4 + $0x98] sm:$0xff]
    %v54 = vld [vmem:[#allocation4 + $0xa0] sm:$0xff]
    %v55 = vld [vmem:[#allocation4 + $0xa8] sm:$0xff]
    %v56 = vld [vmem:[#allocation4 + $0xb0] sm:$0xff]
    %v57 = vld [vmem:[#allocation4 + $0xb8] sm:$0xff]
    %v58 = vsub.f32 %v34, %v38
    %v59 = vsub.f32 %v35, %v39
    %v60 = vsub.f32 %v36, %v40
    %v61 = vsub.f32 %v37, %v41
    %v62 = vsub.f32 %v42, %v46
    %v63 = vsub.f32 %v43, %v47
    %v64 = vsub.f32 %v44, %v48
    %v65 = vsub.f32 %v45, %v49
    %v66 = vsub.f32 %v50, %v54
    %v67 = vsub.f32 %v51, %v55
    %v68 = vsub.f32 %v52, %v56
    %v69 = vsub.f32 %v53, %v57
    %v70 = vmul.f32 %v58, %v58
    %v71 = vmul.f32 %v59, %v59
    %v72 = vmul.f32 %v60, %v60
    %v73 = vmul.f32 %v61, %v61
    %v74 = vmul.f32 %v62, %v62
    %v75 = vmul.f32 %v63, %v63
    %v76 = vmul.f32 %v64, %v64
    %v77 = vmul.f32 %v65, %v65
    %v78 = vmul.f32 %v66, %v66
    %v79 = vmul.f32 %v67, %v67
    %v80 = vmul.f32 %v68, %v68
    %v81 = vmul.f32 %v69, %v69
    %v82 = vadd.f32 %v70, 4e-05
    %v83 = vadd.f32 %v71, 4e-05
    %v84 = vadd.f32 %v72, 4e-05
    %v85 = vadd.f32 %v73, 4e-05
    %v86 = vadd.f32 %v74, 4e-05
    %v87 = vadd.f32 %v75, 4e-05
    %v88 = vadd.f32 %v76, 4e-05
    %v89 = vadd.f32 %v77, 4e-05
    %v90 = vadd.f32 %v78, 4e-05
    %v91 = vadd.f32 %v79, 4e-05
    %v92 = vadd.f32 %v80, 4e-05
    %v93 = vadd.f32 %v81, 4e-05
    %v94 = vrsqrt.pop %v82
    %v95 = vmul.f32 %v94, %v82
    %v96 = vmul.f32 %v95, %v94
    %v97 = vmul.f32 0.5, %v96
    %v98 = vsub.f32 1.5, %v97
    %v99 = vmul.f32 %v94, %v98
    %vm100 = vweird.f32 %v82
    %vm101 = vweird.f32 %v94
    %vm102 = vmor %vm100, %vm101
    %v103 = vsel %vm102, %v94, %v99
    %v104 = vrsqrt.pop %v83
    %v105 = vmul.f32 %v104, %v83
    %v106 = vmul.f32 %v105, %v104
    %v107 = vmul.f32 0.5, %v106
    %v108 = vsub.f32 1.5, %v107
    %v109 = vmul.f32 %v104, %v108
    %vm110 = vweird.f32 %v83
    %vm111 = vweird.f32 %v104
    %vm112 = vmor %vm110, %vm111
    %v113 = vsel %vm112, %v104, %v109
    %v114 = vrsqrt.pop %v84
    %v115 = vmul.f32 %v114, %v84
    %v116 = vmul.f32 %v115, %v114
    %v117 = vmul.f32 0.5, %v116
    %v118 = vsub.f32 1.5, %v117
    %v119 = vmul.f32 %v114, %v118
    %vm120 = vweird.f32 %v84
    %vm121 = vweird.f32 %v114
    %vm122 = vmor %vm120, %vm121
    %v123 = vsel %vm122, %v114, %v119
    %v124 = vrsqrt.pop %v85
    %v125 = vmul.f32 %v124, %v85
    %v126 = vmul.f32 %v125, %v124
    %v127 = vmul.f32 0.5, %v126
    %v128 = vsub.f32 1.5, %v127
    %v129 = vmul.f32 %v124, %v128
    %vm130 = vweird.f32 %v85
    %vm131 = vweird.f32 %v124
    %vm132 = vmor %vm130, %vm131
    %v133 = vsel %vm132, %v124, %v129
    %v134 = vrsqrt.pop %v86
    %v135 = vmul.f32 %v134, %v86
    %v136 = vmul.f32 %v135, %v134
    %v137 = vmul.f32 0.5, %v136
    %v138 = vsub.f32 1.5, %v137
    %v139 = vmul.f32 %v134, %v138
    %vm140 = vweird.f32 %v86
    %vm141 = vweird.f32 %v134
    %vm142 = vmor %vm140, %vm141
    %v143 = vsel %vm142, %v134, %v139
    %v144 = vrsqrt.pop %v87
    %v145 = vmul.f32 %v144, %v87
    %v146 = vmul.f32 %v145, %v144
    %v147 = vmul.f32 0.5, %v146
    %v148 = vsub.f32 1.5, %v147
    %v149 = vmul.f32 %v144, %v148
    %vm150 = vweird.f32 %v87
    %vm151 = vweird.f32 %v144
    %vm152 = vmor %vm150, %vm151
    %v153 = vsel %vm152, %v144, %v149
    %v154 = vrsqrt.pop %v88
    %v155 = vmul.f32 %v154, %v88
    %v156 = vmul.f32 %v155, %v154
    %v157 = vmul.f32 0.5, %v156
    %v158 = vsub.f32 1.5, %v157
    %v159 = vmul.f32 %v154, %v158
    %vm160 = vweird.f32 %v88
    %vm161 = vweird.f32 %v154
    %vm162 = vmor %vm160, %vm161
    %v163 = vsel %vm162, %v154, %v159
    %v164 = vrsqrt.pop %v89
    %v165 = vmul.f32 %v164, %v89
    %v166 = vmul.f32 %v165, %v164
    %v167 = vmul.f32 0.5, %v166
    %v168 = vsub.f32 1.5, %v167
    %v169 = vmul.f32 %v164, %v168
    %vm170 = vweird.f32 %v89
    %vm171 = vweird.f32 %v164
    %vm172 = vmor %vm170, %vm171
    %v173 = vsel %vm172, %v164, %v169
    %v174 = vrsqrt.pop %v90
    %v175 = vmul.f32 %v174, %v90
    %v176 = vmul.f32 %v175, %v174
    %v177 = vmul.f32 0.5, %v176
    %v178 = vsub.f32 1.5, %v177
    %v179 = vmul.f32 %v174, %v178
    %vm180 = vweird.f32 %v90
    %vm181 = vweird.f32 %v174
    %vm182 = vmor %vm180, %vm181
    %v183 = vsel %vm182, %v174, %v179
    %v184 = vrsqrt.pop %v91
    %v185 = vmul.f32 %v184, %v91
    %v186 = vmul.f32 %v185, %v184
    %v187 = vmul.f32 0.5, %v186
    %v188 = vsub.f32 1.5, %v187
    %v189 = vmul.f32 %v184, %v188
    %vm190 = vweird.f32 %v91
    %vm191 = vweird.f32 %v184
    %vm192 = vmor %vm190, %vm191
    %v193 = vsel %vm192, %v184, %v189
    %v194 = vrsqrt.pop %v92
    %v195 = vmul.f32 %v194, %v92
    %v196 = vmul.f32 %v195, %v194
    %v197 = vmul.f32 0.5, %v196
    %v198 = vsub.f32 1.5, %v197
    %v199 = vmul.f32 %v194, %v198
    %vm200 = vweird.f32 %v92
    %vm201 = vweird.f32 %v194
    %vm202 = vmor %vm200, %vm201
    %v203 = vsel %vm202, %v194, %v199
    %v204 = vrsqrt.pop %v93
    %v205 = vmul.f32 %v204, %v93
    %v206 = vmul.f32 %v205, %v204
    %v207 = vmul.f32 0.5, %v206
    %v208 = vsub.f32 1.5, %v207
    %v209 = vmul.f32 %v204, %v208
    %vm210 = vweird.f32 %v93
    %vm211 = vweird.f32 %v204
    %vm212 = vmor %vm210, %vm211
    %v213 = vsel %vm212, %v204, %v209
    %v214 = vmul.f32 %v58, %v103
    %v215 = vmul.f32 %v59, %v113
    %v216 = vmul.f32 %v60, %v123
    %v217 = vmul.f32 %v61, %v133
    %v218 = vmul.f32 %v62, %v143
    %v219 = vmul.f32 %v63, %v153
    %v220 = vmul.f32 %v64, %v163
    %v221 = vmul.f32 %v65, %v173
    %v222 = vmul.f32 %v66, %v183
    %v223 = vmul.f32 %v67, %v193
    %v224 = vmul.f32 %v68, %v203
    %v225 = vmul.f32 %v69, %v213
    %s226 = sld [smem:[#allocation3]]
    %v227 = vstv %s226
    %v228 = vmul.f32 %v227, %v214
    %v229 = vmul.f32 %v227, %v215
    %v230 = vmul.f32 %v227, %v216
    %v231 = vmul.f32 %v227, %v217
    %v232 = vmul.f32 %v227, %v218
    %v233 = vmul.f32 %v227, %v219
    %v234 = vmul.f32 %v227, %v220
    %v235 = vmul.f32 %v227, %v221
    %v236 = vmul.f32 %v227, %v222
    %v237 = vmul.f32 %v227, %v223
    %v238 = vmul.f32 %v227, %v224
    %v239 = vmul.f32 %v227, %v225
    %s240 = sld [smem:[#allocation3 + $0x2]]
    %v241 = vstv %s240
    %v242 = vadd.f32 %v228, %v241
    %v243 = vadd.f32 %v229, %v241
    %v244 = vadd.f32 %v230, %v241
    %v245 = vadd.f32 %v231, %v241
    %v246 = vadd.f32 %v232, %v241
    %v247 = vadd.f32 %v233, %v241
    %v248 = vadd.f32 %v234, %v241
    %v249 = vadd.f32 %v235, %v241
    %v250 = vadd.f32 %v236, %v241
    %v251 = vadd.f32 %v237, %v241
    %v252 = vadd.f32 %v238, %v241
    %v253 = vadd.f32 %v239, %v241
    %s254 = sld [smem:[#allocation3 + $0x1]]
    %v255 = vstv %s254
    %v256 = vmul.f32 %v255, %v214
    %v257 = vmul.f32 %v255, %v215
    %v258 = vmul.f32 %v255, %v216
    %v259 = vmul.f32 %v255, %v217
    %v260 = vmul.f32 %v255, %v218
    %v261 = vmul.f32 %v255, %v219
    %v262 = vmul.f32 %v255, %v220
    %v263 = vmul.f32 %v255, %v221
    %v264 = vmul.f32 %v255, %v222
    %v265 = vmul.f32 %v255, %v223
    %v266 = vmul.f32 %v255, %v224
    %v267 = vmul.f32 %v255, %v225
    %s268 = sld [smem:[#allocation3 + $0x3]]
    %v269 = vstv %s268
    %v270 = vadd.f32 %v256, %v269
    %v271 = vadd.f32 %v257, %v269
    %v272 = vadd.f32 %v258, %v269
    %v273 = vadd.f32 %v259, %v269
    %v274 = vadd.f32 %v260, %v269
    %v275 = vadd.f32 %v261, %v269
    %v276 = vadd.f32 %v262, %v269
    %v277 = vadd.f32 %v263, %v269
    %v278 = vadd.f32 %v264, %v269
    %v279 = vadd.f32 %v265, %v269
    %v280 = vadd.f32 %v266, %v269
    %v281 = vadd.f32 %v267, %v269
    %vm282 = vcmp.ge.f32.partialorder %v242, 0.0
    %vm283 = vcmp.ge.f32.partialorder %v243, 0.0
    %vm284 = vcmp.ge.f32.partialorder %v244, 0.0
    %vm285 = vcmp.ge.f32.partialorder %v245, 0.0
    %vm286 = vcmp.ge.f32.partialorder %v246, 0.0
    %vm287 = vcmp.ge.f32.partialorder %v247, 0.0
    %vm288 = vcmp.ge.f32.partialorder %v248, 0.0
    %vm289 = vcmp.ge.f32.partialorder %v249, 0.0
    %vm290 = vcmp.ge.f32.partialorder %v250, 0.0
    %vm291 = vcmp.ge.f32.partialorder %v251, 0.0
    %vm292 = vcmp.ge.f32.partialorder %v252, 0.0
    %vm293 = vcmp.ge.f32.partialorder %v253, 0.0
    %v294 = vmul.f32 %v242, 0.2
    %v295 = vmul.f32 %v243, 0.2
    %v296 = vmul.f32 %v244, 0.2
    %v297 = vmul.f32 %v245, 0.2
    %v298 = vmul.f32 %v246, 0.2
    %v299 = vmul.f32 %v247, 0.2
    %v300 = vmul.f32 %v248, 0.2
    %v301 = vmul.f32 %v249, 0.2
    %v302 = vmul.f32 %v250, 0.2
    %v303 = vmul.f32 %v251, 0.2
    %v304 = vmul.f32 %v252, 0.2
    %v305 = vmul.f32 %v253, 0.2
    %v306 = vsel %vm282, %v242, %v294
    %v307 = vsel %vm283, %v243, %v295
    %v308 = vsel %vm284, %v244, %v296
    %v309 = vsel %vm285, %v245, %v297
    %v310 = vsel %vm286, %v246, %v298
    %v311 = vsel %vm287, %v247, %v299
    %v312 = vsel %vm288, %v248, %v300
    %v313 = vsel %vm289, %v249, %v301
    %v314 = vsel %vm290, %v250, %v302
    %v315 = vsel %vm291, %v251, %v303
    %v316 = vsel %vm292, %v252, %v304
    %v317 = vsel %vm293, %v253, %v305
    %vm318 = vcmp.ge.f32.partialorder %v270, 0.0
    %vm319 = vcmp.ge.f32.partialorder %v271, 0.0
    %vm320 = vcmp.ge.f32.partialorder %v272, 0.0
    %vm321 = vcmp.ge.f32.partialorder %v273, 0.0
    %vm322 = vcmp.ge.f32.partialorder %v274, 0.0
    %vm323 = vcmp.ge.f32.partialorder %v275, 0.0
    %vm324 = vcmp.ge.f32.partialorder %v276, 0.0
    %vm325 = vcmp.ge.f32.partialorder %v277, 0.0
    %vm326 = vcmp.ge.f32.partialorder %v278, 0.0
    %vm327 = vcmp.ge.f32.partialorder %v279, 0.0
    %vm328 = vcmp.ge.f32.partialorder %v280, 0.0
    %vm329 = vcmp.ge.f32.partialorder %v281, 0.0
    %v330 = vmul.f32 %v270, 0.2
    %v331 = vmul.f32 %v271, 0.2
    %v332 = vmul.f32 %v272, 0.2
    %v333 = vmul.f32 %v273, 0.2
    %v334 = vmul.f32 %v274, 0.2
    %v335 = vmul.f32 %v275, 0.2
    %v336 = vmul.f32 %v276, 0.2
    %v337 = vmul.f32 %v277, 0.2
    %v338 = vmul.f32 %v278, 0.2
    %v339 = vmul.f32 %v279, 0.2
    %v340 = vmul.f32 %v280, 0.2
    %v341 = vmul.f32 %v281, 0.2
    %v342 = vsel %vm318, %v270, %v330
    %v343 = vsel %vm319, %v271, %v331
    %v344 = vsel %vm320, %v272, %v332
    %v345 = vsel %vm321, %v273, %v333
    %v346 = vsel %vm322, %v274, %v334
    %v347 = vsel %vm323, %v275, %v335
    %v348 = vsel %vm324, %v276, %v336
    %v349 = vsel %vm325, %v277, %v337
    %v350 = vsel %vm326, %v278, %v338
    %v351 = vsel %vm327, %v279, %v339
    %v352 = vsel %vm328, %v280, %v340
    %v353 = vsel %vm329, %v281, %v341
    %v354 = vsub.f32 %v306, %v342
    %v355 = vsub.f32 %v307, %v343
    %v356 = vsub.f32 %v308, %v344
    %v357 = vsub.f32 %v309, %v345
    %v358 = vsub.f32 %v310, %v346
    %v359 = vsub.f32 %v311, %v347
    %v360 = vsub.f32 %v312, %v348
    %v361 = vsub.f32 %v313, %v349
    %v362 = vsub.f32 %v314, %v350
    %v363 = vsub.f32 %v315, %v351
    %v364 = vsub.f32 %v316, %v352
    %v365 = vsub.f32 %v317, %v353
    %v366 = vmul.f32 %v354, %v354
    %v367 = vmul.f32 %v355, %v355
    %v368 = vmul.f32 %v356, %v356
    %v369 = vmul.f32 %v357, %v357
    %v370 = vmul.f32 %v358, %v358
    %v371 = vmul.f32 %v359, %v359
    %v372 = vmul.f32 %v360, %v360
    %v373 = vmul.f32 %v361, %v361
    %v374 = vmul.f32 %v362, %v362
    %v375 = vmul.f32 %v363, %v363
    %v376 = vmul.f32 %v364, %v364
    %v377 = vmul.f32 %v365, %v365
    %v378 = vadd.f32 %v366, 4e-05
    %v379 = vadd.f32 %v367, 4e-05
    %v380 = vadd.f32 %v368, 4e-05
    %v381 = vadd.f32 %v369, 4e-05
    %v382 = vadd.f32 %v370, 4e-05
    %v383 = vadd.f32 %v371, 4e-05
    %v384 = vadd.f32 %v372, 4e-05
    %v385 = vadd.f32 %v373, 4e-05
    %v386 = vadd.f32 %v374, 4e-05
    %v387 = vadd.f32 %v375, 4e-05
    %v388 = vadd.f32 %v376, 4e-05
    %v389 = vadd.f32 %v377, 4e-05
    %v390 = vrsqrt.pop %v378
    %v391 = vmul.f32 %v390, %v378
    %v392 = vmul.f32 %v391, %v390
    %v393 = vmul.f32 0.5, %v392
    %v394 = vsub.f32 1.5, %v393
    %v395 = vmul.f32 %v390, %v394
    %vm396 = vweird.f32 %v378
    %vm397 = vweird.f32 %v390
    %vm398 = vmor %vm396, %vm397
    %v399 = vsel %vm398, %v390, %v395
    %v400 = vrsqrt.pop %v379
    %v401 = vmul.f32 %v400, %v379
    %v402 = vmul.f32 %v401, %v400
    %v403 = vmul.f32 0.5, %v402
    %v404 = vsub.f32 1.5, %v403
    %v405 = vmul.f32 %v400, %v404
    %vm406 = vweird.f32 %v379
    %vm407 = vweird.f32 %v400
    %vm408 = vmor %vm406, %vm407
    %v409 = vsel %vm408, %v400, %v405
    %v410 = vrsqrt.pop %v380
    %v411 = vmul.f32 %v410, %v380
    %v412 = vmul.f32 %v411, %v410
    %v413 = vmul.f32 0.5, %v412
    %v414 = vsub.f32 1.5, %v413
    %v415 = vmul.f32 %v410, %v414
    %vm416 = vweird.f32 %v380
    %vm417 = vweird.f32 %v410
    %vm418 = vmor %vm416, %vm417
    %v419 = vsel %vm418, %v410, %v415
    %v420 = vrsqrt.pop %v381
    %v421 = vmul.f32 %v420, %v381
    %v422 = vmul.f32 %v421, %v420
    %v423 = vmul.f32 0.5, %v422
    %v424 = vsub.f32 1.5, %v423
    %v425 = vmul.f32 %v420, %v424
    %vm426 = vweird.f32 %v381
    %vm427 = vweird.f32 %v420
    %vm428 = vmor %vm426, %vm427
    %v429 = vsel %vm428, %v420, %v425
    %v430 = vrsqrt.pop %v382
    %v431 = vmul.f32 %v430, %v382
    %v432 = vmul.f32 %v431, %v430
    %v433 = vmul.f32 0.5, %v432
    %v434 = vsub.f32 1.5, %v433
    %v435 = vmul.f32 %v430, %v434
    %vm436 = vweird.f32 %v382
    %vm437 = vweird.f32 %v430
    %vm438 = vmor %vm436, %vm437
    %v439 = vsel %vm438, %v430, %v435
    %v440 = vrsqrt.pop %v383
    %v441 = vmul.f32 %v440, %v383
    %v442 = vmul.f32 %v441, %v440
    %v443 = vmul.f32 0.5, %v442
    %v444 = vsub.f32 1.5, %v443
    %v445 = vmul.f32 %v440, %v444
    %vm446 = vweird.f32 %v383
    %vm447 = vweird.f32 %v440
    %vm448 = vmor %vm446, %vm447
    %v449 = vsel %vm448, %v440, %v445
    %v450 = vrsqrt.pop %v384
    %v451 = vmul.f32 %v450, %v384
    %v452 = vmul.f32 %v451, %v450
    %v453 = vmul.f32 0.5, %v452
    %v454 = vsub.f32 1.5, %v453
    %v455 = vmul.f32 %v450, %v454
    %vm456 = vweird.f32 %v384
    %vm457 = vweird.f32 %v450
    %vm458 = vmor %vm456, %vm457
    %v459 = vsel %vm458, %v450, %v455
    %v460 = vrsqrt.pop %v385
    %v461 = vmul.f32 %v460, %v385
    %v462 = vmul.f32 %v461, %v460
    %v463 = vmul.f32 0.5, %v462
    %v464 = vsub.f32 1.5, %v463
    %v465 = vmul.f32 %v460, %v464
    %vm466 = vweird.f32 %v385
    %vm467 = vweird.f32 %v460
    %vm468 = vmor %vm466, %vm467
    %v469 = vsel %vm468, %v460, %v465
    %v470 = vrsqrt.pop %v386
    %v471 = vmul.f32 %v470, %v386
    %v472 = vmul.f32 %v471, %v470
    %v473 = vmul.f32 0.5, %v472
    %v474 = vsub.f32 1.5, %v473
    %v475 = vmul.f32 %v470, %v474
    %vm476 = vweird.f32 %v386
    %vm477 = vweird.f32 %v470
    %vm478 = vmor %vm476, %vm477
    %v479 = vsel %vm478, %v470, %v475
    %v480 = vrsqrt.pop %v387
    %v481 = vmul.f32 %v480, %v387
    %v482 = vmul.f32 %v481, %v480
    %v483 = vmul.f32 0.5, %v482
    %v484 = vsub.f32 1.5, %v483
    %v485 = vmul.f32 %v480, %v484
    %vm486 = vweird.f32 %v387
    %vm487 = vweird.f32 %v480
    %vm488 = vmor %vm486, %vm487
    %v489 = vsel %vm488, %v480, %v485
    %v490 = vrsqrt.pop %v388
    %v491 = vmul.f32 %v490, %v388
    %v492 = vmul.f32 %v491, %v490
    %v493 = vmul.f32 0.5, %v492
    %v494 = vsub.f32 1.5, %v493
    %v495 = vmul.f32 %v490, %v494
    %vm496 = vweird.f32 %v388
    %vm497 = vweird.f32 %v490
    %vm498 = vmor %vm496, %vm497
    %v499 = vsel %vm498, %v490, %v495
    %v500 = vrsqrt.pop %v389
    %v501 = vmul.f32 %v500, %v389
    %v502 = vmul.f32 %v501, %v500
    %v503 = vmul.f32 0.5, %v502
    %v504 = vsub.f32 1.5, %v503
    %v505 = vmul.f32 %v500, %v504
    %vm506 = vweird.f32 %v389
    %vm507 = vweird.f32 %v500
    %vm508 = vmor %vm506, %vm507
    %v509 = vsel %vm508, %v500, %v505
    %v510 = vmul.f32 %v354, %v399
    %v511 = vmul.f32 %v355, %v409
    %v512 = vmul.f32 %v356, %v419
    %v513 = vmul.f32 %v357, %v429
    %v514 = vmul.f32 %v358, %v439
    %v515 = vmul.f32 %v359, %v449
    %v516 = vmul.f32 %v360, %v459
    %v517 = vmul.f32 %v361, %v469
    %v518 = vmul.f32 %v362, %v479
    %v519 = vmul.f32 %v363, %v489
    %v520 = vmul.f32 %v364, %v499
    %v521 = vmul.f32 %v365, %v509
    %s522 = sld [smem:[#allocation3 + $0x4]]
    %v523 = vstv %s522
    %v524 = vmul.f32 %v523, %v510
    %v525 = vmul.f32 %v523, %v511
    %v526 = vmul.f32 %v523, %v512
    %v527 = vmul.f32 %v523, %v513
    %v528 = vmul.f32 %v523, %v514
    %v529 = vmul.f32 %v523, %v515
    %v530 = vmul.f32 %v523, %v516
    %v531 = vmul.f32 %v523, %v517
    %v532 = vmul.f32 %v523, %v518
    %v533 = vmul.f32 %v523, %v519
    %v534 = vmul.f32 %v523, %v520
    %v535 = vmul.f32 %v523, %v521
    %s536 = sld [smem:[#allocation3 + $0x5]]
    %v537 = vstv %s536
    %v538 = vadd.f32 %v524, %v537
    %v539 = vadd.f32 %v525, %v537
    %v540 = vadd.f32 %v526, %v537
    %v541 = vadd.f32 %v527, %v537
    %v542 = vadd.f32 %v528, %v537
    %v543 = vadd.f32 %v529, %v537
    %v544 = vadd.f32 %v530, %v537
    %v545 = vadd.f32 %v531, %v537
    %v546 = vadd.f32 %v532, %v537
    %v547 = vadd.f32 %v533, %v537
    %v548 = vadd.f32 %v534, %v537
    %v549 = vadd.f32 %v535, %v537
    %550 = vst [vmem:[#allocation7] sm:$0xff] %v538
    %551 = vst [vmem:[#allocation7 + $0x8] sm:$0xff] %v539
    %552 = vst [vmem:[#allocation7 + $0x10] sm:$0xff] %v540
    %553 = vst [vmem:[#allocation7 + $0x18] sm:$0xff] %v541
    %s554 = scalar_lea.vmem [#allocation7], 32
    %555 = vst [vmem:[%s554] sm:$0xff] %v542
    %556 = vst [vmem:[%s554 + $0x8] sm:$0xff] %v543
    %557 = vst [vmem:[%s554 + $0x10] sm:$0xff] %v544
    %558 = vst [vmem:[%s554 + $0x18] sm:$0xff] %v545
    %v559 = vmul.f32 %v546, %v546
    %v560 = vmul.f32 %v547, %v547
    %v561 = vmul.f32 %v548, %v548
    %v562 = vmul.f32 %v549, %v549
    %s563 = scalar_lea.vmem [#allocation7], 64
    %564 = vst [vmem:[%s563] sm:$0xff] %v559
    %565 = vst [vmem:[%s563 + $0x8] sm:$0xff] %v560
    %566 = vst [vmem:[%s563 + $0x10] sm:$0xff] %v561
    %567 = vst [vmem:[%s563 + $0x18] sm:$0xff] %v562
    // Predicated region
    $region10: #{tpu_custom_call.1} parent=1 // pred_check
      _
    $region11: #{tpu_custom_call.1} parent=1 // pred_check_branch
      %569 = sbr.rel (0) target = $region13
    $region12: #{tpu_custom_call.1} parent=1 // pred_region
      %571 = vsyncadd [#allocation6], 0
      %s572 = sshll.u32 [#allocation7], 4
      %s573 = int_to_ptr.vmem [resolvable:$true] %s572
      %s574 = sshll.u32 %s2, 4
      %s575 = int_to_ptr.hbm [resolvable:$true] %s574
      %580 = dma.vmem_to_hbm [thread:$0]  %s573, 1536, %s575, [#allocation6], 512, 512, 32
    $region13: #{tpu_custom_call.1} parent=1 // pred_fallthru
      _
    // Predicated region
    $region14: #{tpu_custom_call.1} parent=1 // pred_check
      _
    $region15: #{tpu_custom_call.1} parent=1 // pred_check_branch
      %582 = sbr.rel (0) target = $region17
    $region16: #{tpu_custom_call.1} parent=1 // pred_region
      %584 = dma.done [#allocation6], 1536
    $region17: #{tpu_custom_call.1} parent=1 // pred_fallthru
      _
    %585 = vsyncpa [#allocation5], 1
    %586 = vsyncpa [#allocation6], 1

</llo_original>
